<compile_context>
chip_gen: v5e
topology: v5e:2x2
jax: 0.10.0
libtpu: 0.0.40
codegen_flags: <defaults>
</compile_context>

<pallas_src>
import jax
import jax.numpy as jnp
from jax.experimental import pallas as pl
from jax.experimental.pallas import tpu as pltpu


def _round_up(x, m):
    return ((x + m - 1) // m) * m


# ----------------------------------------------------------------------------
# Kernel 1: edge-type-prediction objective (linear head + cross-entropy).
# Transposed domain: classes on sublanes, edges on lanes.
# ----------------------------------------------------------------------------
def _edge_ce_kernel(x_ref, wt_ref, b_ref, label_ref, loss_ref):
    # x:     [TILE_E, H] bf16   (edge tile)
    # wt:    [C, H]      bf16   (W^T, stays resident)
    # b:     [C, 1]      f32
    # label: [1, TILE_E] int32
    # loss:  [1, TILE_E] f32    (lane-dense output)
    logits_t = jnp.dot(
        wt_ref[...], x_ref[...].T, preferred_element_type=jnp.float32
    ) + b_ref[...]                                            # [C, TILE_E] f32

    m = jnp.max(logits_t, axis=0, keepdims=True)              # [1, TILE_E]
    lse = m + jnp.log(jnp.sum(jnp.exp(logits_t - m), axis=0, keepdims=True))

    C, TE = logits_t.shape
    row = jax.lax.broadcasted_iota(jnp.int32, (C, TE), 0)
    onehot = (row == label_ref[...]).astype(jnp.float32)      # [C, TILE_E]
    picked = jnp.sum(logits_t * onehot, axis=0, keepdims=True)

    loss_ref[...] = lse - picked


def edge_ce_loss(x, w, b, edge_type, *, tile_e=4096):
    """Per-edge cross-entropy of a linear head; returns [E] f32."""
    E, H = x.shape
    C = w.shape[1]

    TILE_E = min(tile_e, _round_up(E, 128))
    E_pad = _round_up(E, TILE_E)

    labels = edge_type.astype(jnp.int32)
    x_p = x
    if E_pad != E:
        x_p = jnp.pad(x, ((0, E_pad - E), (0, 0)))
        labels = jnp.pad(labels, (0, E_pad - E))

    x_bf = x_p.astype(jnp.bfloat16)                 # halve HBM/DMA traffic
    wt = jnp.transpose(w).astype(jnp.bfloat16)      # [C, H], tiny, resident
    b_col = b.astype(jnp.float32).reshape(C, 1)
    labels2d = labels.reshape(1, E_pad)

    loss = pl.pallas_call(
        _edge_ce_kernel,
        out_shape=jax.ShapeDtypeStruct((1, E_pad), jnp.float32),
        grid_spec=pltpu.PrefetchScalarGridSpec(
            num_scalar_prefetch=0,
            grid=(E_pad // TILE_E,),
            in_specs=[
                pl.BlockSpec((TILE_E, H), lambda i: (i, 0)),   # x tile (pipelined)
                pl.BlockSpec((C, H), lambda i: (0, 0)),        # W^T (resident)
                pl.BlockSpec((C, 1), lambda i: (0, 0)),        # bias (resident)
                pl.BlockSpec((1, TILE_E), lambda i: (0, i)),   # labels (lane-dense)
            ],
            out_specs=pl.BlockSpec((1, TILE_E), lambda i: (0, i)),
        ),
        compiler_params=pltpu.CompilerParams(
            dimension_semantics=("parallel",),     # edge tiles split across TCs (v7x)
            vmem_limit_bytes=48 * 1024 * 1024,     # safe on v7x (64 MiB physical)
        ),
    )(x_bf, wt, b_col, labels2d)
    return loss.reshape(E_pad)[:E]


# ----------------------------------------------------------------------------
# Kernel 2: validation score = mean(loss | y==1) - mean(loss | y==0).
# Tiled reduction with SMEM scalar accumulators (P3 pattern).
# ----------------------------------------------------------------------------
def _val_score_kernel(loss_ref, y_ref, out_ref, acc_ref):
    i = pl.program_id(0)

    @pl.when(i == 0)
    def _():
        for k in range(4):
            acc_ref[k] = 0.0

    l = loss_ref[...]                      # [TILE_R, 128] f32
    y = y_ref[...]                         # [TILE_R, 128] f32 (1 mal, 0 ben, -1 pad)
    mal = (y == 1.0).astype(jnp.float32)
    ben = (y == 0.0).astype(jnp.float32)
    acc_ref[0] += jnp.sum(l * mal)
    acc_ref[1] += jnp.sum(mal)
    acc_ref[2] += jnp.sum(l * ben)
    acc_ref[3] += jnp.sum(ben)

    @pl.when(i == pl.num_programs(0) - 1)
    def _():
        mal_mean = acc_ref[0] / jnp.maximum(acc_ref[1], 1.0)   # guard: no NaN
        ben_mean = acc_ref[2] / jnp.maximum(acc_ref[3], 1.0)
        out_ref[0, 0] = mal_mean - ben_mean


def val_score(losses, ys, *, tile_rows=512):
    """losses: [N] f32, ys: [N] (0/1) -> scalar f32."""
    N = losses.shape[0]
    LANE = 128
    rows = -(-N // LANE)
    TILE_R = min(tile_rows, _round_up(rows, 8))
    rows_pad = _round_up(rows, TILE_R)
    N_pad = rows_pad * LANE

    l = jnp.pad(losses.astype(jnp.float32), (0, N_pad - N))
    y = jnp.pad(ys.astype(jnp.float32), (0, N_pad - N), constant_values=-1.0)
    l2 = l.reshape(rows_pad, LANE)         # fill sublanes AND lanes
    y2 = y.reshape(rows_pad, LANE)

    out = pl.pallas_call(
        _val_score_kernel,
        out_shape=jax.ShapeDtypeStruct((1, 1), jnp.float32),
        grid_spec=pltpu.PrefetchScalarGridSpec(
            num_scalar_prefetch=0,
            grid=(rows_pad // TILE_R,),
            in_specs=[
                pl.BlockSpec((TILE_R, LANE), lambda i: (i, 0)),
                pl.BlockSpec((TILE_R, LANE), lambda i: (i, 0)),
            ],
            out_specs=pl.BlockSpec((1, 1), lambda i: (0, 0)),
            scratch_shapes=[pltpu.SMEM((4,), jnp.float32)],
        ),
        compiler_params=pltpu.CompilerParams(
            dimension_semantics=("arbitrary",),    # sequential accumulation axis
            vmem_limit_bytes=48 * 1024 * 1024,
        ),
    )(l2, y2)
    return out[0, 0]


# ----------------------------------------------------------------------------
# Synthetic objective (the module the wrapper wraps): deterministic params.
# ----------------------------------------------------------------------------
class EdgeTypeObjective:
    def __init__(self, hidden=32, num_edge_types=8):
        kw, kb = jax.random.split(jax.random.PRNGKey(42))
        self.w = jax.random.normal(kw, (hidden, num_edge_types), jnp.float32) * 0.1
        self.b = jax.random.normal(kb, (num_edge_types,), jnp.float32) * 0.01

    def __call__(self, x, *, edge_type, y_edge, inference, **kwargs):
        loss = edge_ce_loss(x, self.w, self.b, edge_type)  # per-edge losses [E]
        return {"loss": loss}


# ----------------------------------------------------------------------------
# ValidationWrapper: same forward semantics as the PyTorch module.
# ----------------------------------------------------------------------------
class ValidationWrapper:
    def __init__(self, objective, graph_reindexer, is_edge_type_prediction, use_few_shot):
        self.objective = objective
        self.graph_reindexer = graph_reindexer
        self.is_edge_type_prediction = is_edge_type_prediction
        self.use_few_shot = use_few_shot
        self.losses = []
        self.ys = []

    def forward(self, edge_type, y_edge, validation, inference, *args, **kwargs):
        results = self.objective(
            *args, edge_type=edge_type, y_edge=y_edge, inference=inference, **kwargs
        )
        assert isinstance(results, dict), "Return value of an objective should be a dict"
        loss_or_losses = results["loss"]
        if validation and self.use_few_shot:
            # extend() on per-element tensors in torch ~= accumulating arrays here
            self.losses.append(jnp.reshape(loss_or_losses, (-1,)))
            self.ys.append(jnp.reshape(y_edge, (-1,)))
        return results

    __call__ = forward

    def get_val_score(self):
        # TODO(synk): the torch module also log()s the two class means; no Pallas
        # equivalent for host-side logging, omitted to keep stdout clean.
        if self.use_few_shot:
            losses = jnp.concatenate(self.losses)
            ys = jnp.concatenate(self.ys)
            score = val_score(losses, ys)  # Pallas tiled masked-mean reduction
        else:
            score = 0.0
        self.losses = []
        self.ys = []
        return score


if __name__ == "__main__":
    E, H, C = 16, 32, 8  # edges, hidden dim, num edge types

    key = jax.random.PRNGKey(0)
    kx, kt = jax.random.split(key)
    x = jax.random.normal(kx, (E, H), jnp.float32)              # edge features
    edge_type = jax.random.randint(kt, (E,), 0, C, jnp.int32)   # target edge types
    y_edge = (jnp.arange(E, dtype=jnp.int32) % 2)               # 0/1 labels (both present)

    objective = EdgeTypeObjective(hidden=H, num_edge_types=C)
    wrapper = ValidationWrapper(
        objective, graph_reindexer=None, is_edge_type_prediction=True, use_few_shot=True
    )

    # Two validation "batches" through the wrapper's forward.
    res1 = wrapper(edge_type, y_edge, validation=True, inference=False, x=x)
    res2 = wrapper(edge_type, y_edge, validation=True, inference=False, x=x * 0.5)
    jax.block_until_ready(res1["loss"])
    jax.block_until_ready(res2["loss"])

    # Pure-JAX reference (f32) for the first batch's CE loss; loose tolerance
    # because the kernel feeds the MXU bf16 inputs.
    logits_ref = x @ objective.w + objective.b
    lse_ref = jax.nn.logsumexp(logits_ref, axis=-1)
    loss_ref = lse_ref - jnp.take_along_axis(
        logits_ref, edge_type[:, None], axis=-1
    )[:, 0]
    assert bool(jnp.all(jnp.abs(res1["loss"] - loss_ref) < 0.15)), "CE loss mismatch"

    score = wrapper.get_val_score()
    jax.block_until_ready(score)

    # Reference score check + sanity.
    all_l = jnp.concatenate([res1["loss"], res2["loss"]])
    all_y = jnp.concatenate([y_edge, y_edge]).astype(jnp.float32)
    ref_score = (jnp.sum(all_l * (all_y == 1)) / jnp.sum(all_y == 1)
                 - jnp.sum(all_l * (all_y == 0)) / jnp.sum(all_y == 0))
    assert bool(jnp.isfinite(score)), "validation score is not finite"
    assert bool(jnp.abs(score - ref_score) < 1e-3), "val score mismatch"
    print("KERNEL_OK")
</pallas_src>

<mosaic_0001>
module attributes {stable_mosaic.version = 11 : i64} {
  func.func @_edge_ce_kernel(%arg0: i32, %arg1: memref<128x32xbf16, #tpu.memory_space<vmem>>, %arg2: memref<8x32xbf16, #tpu.memory_space<vmem>>, %arg3: memref<8x1xf32, #tpu.memory_space<vmem>>, %arg4: memref<1x128xi32, #tpu.memory_space<vmem>>, %arg5: memref<1x128xf32, #tpu.memory_space<vmem>>) attributes {dimension_semantics = [#tpu.dimension_semantics<parallel>], iteration_bounds = array<i64: 1>, scalar_prefetch = 0 : i64, scratch_operands = 0 : i64, tpu.core_type = #tpu.core_type<tc>, window_params = [{transform_indices = @transform_0, window_bounds = array<i64: 128, 32>}, {pipeline_mode = #tpu.pipeline_mode<synchronous>, transform_indices = @transform_1, window_bounds = array<i64: 8, 32>}, {pipeline_mode = #tpu.pipeline_mode<synchronous>, transform_indices = @transform_2, window_bounds = array<i64: 8, 1>}, {transform_indices = @transform_3, window_bounds = array<i64: 1, 128>}, {transform_indices = @transform_4, window_bounds = array<i64: 1, 128>}]} {
    %c0 = arith.constant 0 : index
    %c0_0 = arith.constant 0 : index
    %0 = vector.load %arg2[%c0, %c0_0] : memref<8x32xbf16, #tpu.memory_space<vmem>>, vector<8x32xbf16>
    %c0_1 = arith.constant 0 : index
    %c0_2 = arith.constant 0 : index
    %1 = vector.load %arg1[%c0_1, %c0_2] : memref<128x32xbf16, #tpu.memory_space<vmem>>, vector<128x32xbf16>
    %2 = tpu.transpose %1, [1, 0] : vector<128x32xbf16> -> vector<32x128xbf16>
    %cst = arith.constant dense<0.000000e+00> : vector<8x128xf32>
    %3 = tpu.matmul %0, %2, %cst {dimension_numbers = #tpu.dot_dimension_numbers<[1], [0], [0], [1], [0, 0, 1, 1], [], []>} : vector<8x32xbf16>, vector<32x128xbf16>, vector<8x128xf32> -> vector<8x128xf32>
    %c0_3 = arith.constant 0 : index
    %c0_4 = arith.constant 0 : index
    %4 = vector.load %arg3[%c0_3, %c0_4] : memref<8x1xf32, #tpu.memory_space<vmem>>, vector<8x1xf32>
    %5 = vector.broadcast %4 : vector<8x1xf32> to vector<8x128xf32>
    %6 = arith.addf %3, %5 : vector<8x128xf32>
    %cst_5 = arith.constant dense<0xFF800000> : vector<128xf32>
    %7 = vector.multi_reduction <maximumf>, %6, %cst_5 [0] : vector<8x128xf32> to vector<128xf32>
    %8 = vector.shape_cast %7 : vector<128xf32> to vector<1x128xf32>
    %9 = vector.broadcast %8 : vector<1x128xf32> to vector<8x128xf32>
    %10 = arith.subf %6, %9 : vector<8x128xf32>
    %11 = math.exp %10 : vector<8x128xf32>
    %cst_6 = arith.constant dense<0.000000e+00> : vector<128xf32>
    %12 = vector.multi_reduction <add>, %11, %cst_6 [0] : vector<8x128xf32> to vector<128xf32>
    %13 = vector.shape_cast %12 : vector<128xf32> to vector<1x128xf32>
    %14 = math.log %13 : vector<1x128xf32>
    %15 = arith.addf %8, %14 : vector<1x128xf32>
    %16 = tpu.iota {dimensions = array<i32: 0>} : vector<8x128xi32>
    %c0_7 = arith.constant 0 : index
    %c0_8 = arith.constant 0 : index
    %17 = vector.load %arg4[%c0_7, %c0_8] : memref<1x128xi32, #tpu.memory_space<vmem>>, vector<1x128xi32>
    %18 = vector.broadcast %17 : vector<1x128xi32> to vector<8x128xi32>
    %19 = arith.cmpi eq, %16, %18 : vector<8x128xi32>
    %20 = arith.extui %19 : vector<8x128xi1> to vector<8x128xi32>
    %21 = arith.sitofp %20 : vector<8x128xi32> to vector<8x128xf32>
    %22 = arith.mulf %6, %21 : vector<8x128xf32>
    %cst_9 = arith.constant dense<0.000000e+00> : vector<128xf32>
    %23 = vector.multi_reduction <add>, %22, %cst_9 [0] : vector<8x128xf32> to vector<128xf32>
    %24 = vector.shape_cast %23 : vector<128xf32> to vector<1x128xf32>
    %25 = arith.subf %15, %24 : vector<1x128xf32>
    %c0_10 = arith.constant 0 : index
    %c0_11 = arith.constant 0 : index
    %26 = vector.load %arg5[%c0_10, %c0_11] : memref<1x128xf32, #tpu.memory_space<vmem>>, vector<1x128xf32>
    tpu.vector_store %arg5[%c0_10, %c0_11], %25 {strides = array<i32>} : memref<1x128xf32, #tpu.memory_space<vmem>>, vector<1x128xf32>,
    return
  }
  func.func @transform_0(%arg0: i32) -> (i32, i32) {
    %c0_i32 = arith.constant 0 : i32
    %c0_i32_0 = arith.constant 0 : i32
    return %arg0, %c0_i32 : i32, i32
  }
  func.func @transform_1(%arg0: i32) -> (i32, i32) {
    %c0_i32 = arith.constant 0 : i32
    %c0_i32_0 = arith.constant 0 : i32
    %c0_i32_1 = arith.constant 0 : i32
    return %c0_i32, %c0_i32_0 : i32, i32
  }
  func.func @transform_2(%arg0: i32) -> (i32, i32) {
    %c0_i32 = arith.constant 0 : i32
    %c0_i32_0 = arith.constant 0 : i32
    %c0_i32_1 = arith.constant 0 : i32
    return %c0_i32, %c0_i32_0 : i32, i32
  }
  func.func @transform_3(%arg0: i32) -> (i32, i32) {
    %c0_i32 = arith.constant 0 : i32
    %c0_i32_0 = arith.constant 0 : i32
    return %c0_i32, %arg0 : i32, i32
  }
  func.func @transform_4(%arg0: i32) -> (i32, i32) {
    %c0_i32 = arith.constant 0 : i32
    %c0_i32_0 = arith.constant 0 : i32
    return %c0_i32, %arg0 : i32, i32
  }
}

</mosaic_0001>

<llo_original>
// kernel: tpu_custom_call.1
$region0: #{tpu_custom_call.1}
  #allocation0 [shape = 'u32[]', space=smem, size = 0x4, offset = 0x4, fixed_abs, tag = 'smem constant byte address 0x4 - core index']
  #allocation1 [shape = 'u32[72,128]{1,0:T(1,128)}', space=vmem, size = 0x9000, scoped, tag = 'internal scratch']
  %s0 = inlined_call_operand.vmem [shape: bf16[128,32], index: 0, kind: input, shape index: {}]
  %s1 = inlined_call_operand.vmem [shape: bf16[8,32], index: 1, kind: input, shape index: {}]
  %s2 = inlined_call_operand.vmem [shape: f32[8,1], index: 2, kind: input, shape index: {}]
  %s3 = inlined_call_operand.vmem [shape: s32[1,128], index: 3, kind: input, shape index: {}]
  %s4 = inlined_call_operand.hbm [shape: f32[1,128], index: 4, kind: output, shape index: {}]
  %s5 = sld [smem:[#allocation0]]
  $region26: #{tpu_custom_call.1} parent=0
    _
  %s7 = ssub.s32 1, %s5
  %s8 = scalar_select 0, %s7, %s5
  $region1: #{tpu_custom_call.1} parent=0
    #allocation2 [shape = 'u8[512]{0}', space=vmem, size = 0x400, scoped, tag = 'output window, operand 0, single buffered']
    #allocation3 [shape = 's32[1]{0}', space=sflag, size = 0x4, scoped, tag = 'scoped memory for tpu_custom_call.1']
    %9 = vsyncpa [#allocation3], 0
    // Predicated region
    $region2: #{tpu_custom_call.1} parent=1 // pred_check
      _
    $region3: #{tpu_custom_call.1} parent=1 // pred_check_branch
      %11 = sbr.rel (0) target = $region5
    $region4: #{tpu_custom_call.1} parent=1 // pred_region
      _
    $region5: #{tpu_custom_call.1} parent=1 // pred_fallthru
      _
    // Predicated region
    $region6: #{tpu_custom_call.1} parent=1 // pred_check
      _
    $region7: #{tpu_custom_call.1} parent=1 // pred_check_branch
      %13 = sbr.rel (0) target = $region9
    $region8: #{tpu_custom_call.1} parent=1 // pred_region
      _
    $region9: #{tpu_custom_call.1} parent=1 // pred_fallthru
      _
    // Predicated region
    $region10: #{tpu_custom_call.1} parent=1 // pred_check
      _
    $region11: #{tpu_custom_call.1} parent=1 // pred_check_branch
      %15 = sbr.rel (0) target = $region13
    $region12: #{tpu_custom_call.1} parent=1 // pred_region
      _
    $region13: #{tpu_custom_call.1} parent=1 // pred_fallthru
      _
    // Predicated region
    $region14: #{tpu_custom_call.1} parent=1 // pred_check
      _
    $region15: #{tpu_custom_call.1} parent=1 // pred_check_branch
      %17 = sbr.rel (0) target = $region17
    $region16: #{tpu_custom_call.1} parent=1 // pred_region
      _
    $region17: #{tpu_custom_call.1} parent=1 // pred_fallthru
      _
    %v18 = vld [vmem:[%s1] sm:$0xf]
    %v19 = vld [vmem:[%s0] sm:$0xf]
    %v20 = vld [vmem:[%s0 + $0x4] sm:$0xf]
    %v21 = vld [vmem:[%s0 + $0x8] sm:$0xf]
    %v22 = vld [vmem:[%s0 + $0xc] sm:$0xf]
    %v23 = vld [vmem:[%s0 + $0x10] sm:$0xf]
    %v24 = vld [vmem:[%s0 + $0x14] sm:$0xf]
    %v25 = vld [vmem:[%s0 + $0x18] sm:$0xf]
    %v26 = vld [vmem:[%s0 + $0x1c] sm:$0xf]
    %v27 = vld [vmem:[%s0 + $0x20] sm:$0xf]
    %v28 = vld [vmem:[%s0 + $0x24] sm:$0xf]
    %v29 = vld [vmem:[%s0 + $0x28] sm:$0xf]
    %v30 = vld [vmem:[%s0 + $0x2c] sm:$0xf]
    %v31 = vld [vmem:[%s0 + $0x30] sm:$0xf]
    %v32 = vld [vmem:[%s0 + $0x34] sm:$0xf]
    %v33 = vld [vmem:[%s0 + $0x38] sm:$0xf]
    %v34 = vld [vmem:[%s0 + $0x3c] sm:$0xf]
    %v35 = vld [vmem:[%s2] sm:$0xff]
    %37 = vset.pattern.permute.xlu0 0
    %38 = vperm.xlu0 %37, %v35
    %v39 = vpop.permute.xlu0 %38
    %v57 = vunpack.c.l.b16 %v19
    %v58 = vunpack.c.l.b16 %v20
    %v59 = vunpack.c.l.b16 %v21
    %v60 = vunpack.c.l.b16 %v22
    %v61 = vunpack.c.l.b16 %v23
    %v62 = vunpack.c.l.b16 %v24
    %v63 = vunpack.c.l.b16 %v25
    %v64 = vunpack.c.l.b16 %v26
    %v65 = vunpack.c.l.b16 %v27
    %v66 = vunpack.c.l.b16 %v28
    %v67 = vunpack.c.l.b16 %v29
    %v68 = vunpack.c.l.b16 %v30
    %v69 = vunpack.c.l.b16 %v31
    %v70 = vunpack.c.l.b16 %v32
    %v71 = vunpack.c.l.b16 %v33
    %v72 = vunpack.c.l.b16 %v34
    %v73 = vpack.c.b16 %v58, %v57
    %v74 = vpack.c.b16 %v60, %v59
    %v75 = vpack.c.b16 %v62, %v61
    %v76 = vpack.c.b16 %v64, %v63
    %v77 = vpack.c.b16 %v66, %v65
    %v78 = vpack.c.b16 %v68, %v67
    %v79 = vpack.c.b16 %v70, %v69
    %v80 = vpack.c.b16 %v72, %v71
    %vm81 = vcmask 261120
    %v83 = vsel %vm81, %v18, 0
    %v86 = vsel %vm81, %v73, 0
    %v89 = vsel %vm81, %v74, 0
    %v92 = vsel %vm81, %v75, 0
    %v95 = vsel %vm81, %v76, 0
    %v98 = vsel %vm81, %v77, 0
    %v101 = vsel %vm81, %v78, 0
    %v104 = vsel %vm81, %v79, 0
    %v107 = vsel %vm81, %v80, 0
    %109 = vmatpush.bf16.xpose.msra.mxu0 %v107
    %110 = vmatpush.bf16.xpose.msra.mxu0 %v104
    %111 = vmatpush.bf16.xpose.msra.mxu0 %v101
    %112 = vmatpush.bf16.xpose.msra.mxu0 %v98
    %113 = vmatpush.bf16.xpose.msra.mxu0 %v95
    %114 = vmatpush.bf16.xpose.msra.mxu0 %v92
    %115 = vmatpush.bf16.xpose.msra.mxu0 %v89
    %116 = vmatpush.bf16.xpose.msra.mxu0 %v86
    %117 = vmatmul.bf16.gmra.mxu0 %v83
    %v118 = vpop.f32.mrf.mxu0
    %v119 = vadd.f32 %v39, %v118
    %v120 = vpop.f32.mrf.mxu0
    %121 = vdwg.mxu0
    %v122 = vrot.slane %v119, 4
    %v123 = vmax.f32 %v119, %v122
    %v124 = vrot.slane %v123, 2
    %v125 = vmax.f32 %v123, %v124
    %v126 = vrot.slane %v125, 1
    %v127 = vmax.f32 %v125, %v126
    %v128 = vsub.f32 %v119, %v127
    %v129 = vmul.f32 %v128, 1.442695
    %v130 = vpow.pop %v129
    %v131 = vrot.slane %v130, 4
    %v132 = vadd.f32 %v130, %v131
    %v133 = vrot.slane %v132, 2
    %v134 = vadd.f32 %v132, %v133
    %v135 = vrot.slane %v134, 1
    %v136 = vadd.f32 %v134, %v135
    %v137 = vlog2.pop %v136
    %v138 = vmul.f32 %v137, 0.6931472
    %v139 = vadd.f32 %v127, %v138
    %v140 = vlaneseq
    %v141 = vshrl.u32 %v140, 7
    %v142 = vld [vmem:[%s3] sm:$0x1]
    %v143 = vperm.slane %v142, 0
    %vm144 = vcmp.eq.s32.totalorder %v141, %v143
    %v145 = vsel %vm144, 1, 0
    %v146 = vcvt.s32.f32 %v145
    %v147 = vmul.f32 %v119, %v146
    %v148 = vrot.slane %v147, 4
    %v149 = vadd.f32 %v147, %v148
    %v150 = vrot.slane %v149, 2
    %v151 = vadd.f32 %v149, %v150
    %v152 = vrot.slane %v151, 1
    %v153 = vadd.f32 %v151, %v152
    %v154 = vsub.f32 %v139, %v153
    %155 = vst [vmem:[#allocation2] sm:$0x1] %v154
    // Predicated region
    $region18: #{tpu_custom_call.1} parent=1 // pred_check
      _
    $region19: #{tpu_custom_call.1} parent=1 // pred_check_branch
      %157 = sbr.rel (0) target = $region21
    $region20: #{tpu_custom_call.1} parent=1 // pred_region
      %159 = vsyncadd [#allocation3], 0
      %s161 = sshll.u32 [#allocation2], 4
      %s162 = int_to_ptr.vmem [resolvable:$true] %s161
      %s163 = sshll.u32 %s4, 4
      %s164 = int_to_ptr.hbm [resolvable:$true] %s163
      %166 = dma.vmem_to_hbm [thread:$0]  %s162, 16, %s164, [#allocation3]
    $region21: #{tpu_custom_call.1} parent=1 // pred_fallthru
      _
    // Predicated region
    $region22: #{tpu_custom_call.1} parent=1 // pred_check
      _
    $region23: #{tpu_custom_call.1} parent=1 // pred_check_branch
      %168 = sbr.rel (0) target = $region25
    $region24: #{tpu_custom_call.1} parent=1 // pred_region
      %170 = dma.done [#allocation3], 16
    $region25: #{tpu_custom_call.1} parent=1 // pred_fallthru
      _
    %171 = vsyncpa [#allocation3], 1

</llo_original>
